<compile_context>
chip_gen: v5e
topology: v5e:2x2
jax: 0.10.0
libtpu: 0.0.40
codegen_flags: <defaults>
</compile_context>

<pallas_src>
import jax
import jax.numpy as jnp
from jax.experimental import pallas as pl
from jax.experimental.pallas import tpu as pltpu


def _make_mixer_kernel(W, S, P):
    """Build a kernel that, for each rank r+1 (r in [0, W-2]), copies:
         x[r+1]              -> out[r] rows [P : S+P]   (body)
         x[r,  S-P : S]      -> out[r] rows [0 : P]     (halo from rank r)
       All copies are plain HBM->HBM DMAs; no VMEM is touched."""

    def kernel(x_ref, *rest):
        # rest = (out_ref_0, ..., out_ref_{W-2}, dma_sem)
        out_refs = rest[:-1]
        sem = rest[-1]

        copies = []
        for r in range(W - 1):
            # Body shard of rank r+1 -> output rows [P:].
            body_cp = pltpu.make_async_copy(
                x_ref.at[r + 1],
                out_refs[r].at[:, pl.ds(P, S), :],
                sem.at[r, 0],
            )
            # Last P rows of rank r's shard -> output rows [:P].
            halo_cp = pltpu.make_async_copy(
                x_ref.at[r, :, pl.ds(S - P, P), :],
                out_refs[r].at[:, pl.ds(0, P), :],
                sem.at[r, 1],
            )
            body_cp.start()
            halo_cp.start()
            copies.append(body_cp)
            copies.append(halo_cp)

        # Wait only after every DMA has been issued -> maximum overlap.
        for cp in copies:
            cp.wait()

    return kernel


def sequence_parallel_mixer_forward(x_sharded, padding):
    """x_sharded: [W, B, S, D] (one shard per "rank").

    Returns a list of per-rank outputs:
      rank 0    -> [B, S, D]        (unchanged shard)
      rank r>0  -> [B, S+padding, D] (prev rank's last `padding` tokens ++ shard)
    """
    W, B, S, D = x_sharded.shape
    if W == 1:
        # world_size == 1 path of the PyTorch forward: identity.
        return [x_sharded[0]]
    if padding == 0:
        # padding == 0: every rank's output is its own shard, unchanged.
        return [x_sharded[r] for r in range(W)]

    P = int(padding)
    if not (0 < P <= S):
        raise ValueError(
            f"padding must satisfy 0 < padding <= seq_len; got {P} vs S={S}")

    itemsize = jnp.dtype(x_sharded.dtype).itemsize
    # Per rank r>0 we read S body rows + P halo rows and write S+P rows.
    nbytes_one_way = (W - 1) * B * (S + P) * D * itemsize

    out_shapes = tuple(
        jax.ShapeDtypeStruct((B, S + P, D), x_sharded.dtype)
        for _ in range(W - 1)
    )

    outs = pl.pallas_call(
        _make_mixer_kernel(W, S, P),
        out_shape=out_shapes,
        # Everything stays in HBM; the kernel body drives the DMAs itself.
        in_specs=[pl.BlockSpec(memory_space=pl.ANY)],
        out_specs=tuple(pl.BlockSpec(memory_space=pl.ANY) for _ in range(W - 1)),
        scratch_shapes=[pltpu.SemaphoreType.DMA((W - 1, 2))],
        cost_estimate=pl.CostEstimate(
            flops=0,
            transcendentals=0,
            bytes_accessed=2 * nbytes_one_way,  # read + write
        ),
    )(x_sharded)

    if not isinstance(outs, (list, tuple)):
        outs = (outs,)

    # Rank 0: its shard, untouched (no kernel work, no output copy).
    return [x_sharded[0]] + list(outs)


def _reference_forward(x_sharded, padding):
    W, B, S, D = x_sharded.shape
    if W == 1:
        return [x_sharded[0]]
    if padding == 0:
        return [x_sharded[r] for r in range(W)]
    outs = [x_sharded[0]]
    for r in range(1, W):
        halo = x_sharded[r - 1, :, S - padding:, :]
        outs.append(jnp.concatenate([halo, x_sharded[r]], axis=1))
    return outs


if __name__ == "__main__":
    W, B, S, D = 3, 2, 16, 128   # world_size=3 "ranks", seq=16 per rank
    PADDING = 8

    key = jax.random.PRNGKey(0)
    x = jax.random.normal(key, (W, B, S, D), dtype=jnp.float32)

    outs = sequence_parallel_mixer_forward(x, PADDING)
    outs = [jax.block_until_ready(o) for o in outs]

    refs = _reference_forward(x, PADDING)
    assert len(outs) == len(refs)
    for o, ref in zip(outs, refs):
        assert o.shape == ref.shape, (o.shape, ref.shape)
        assert jnp.allclose(o, ref), "mismatch vs reference"

    print("KERNEL_OK")
</pallas_src>

<mosaic_0001>
module attributes {stable_mosaic.version = 11 : i64} {
  func.func @kernel(%arg0: memref<3x2x16x128xf32, #tpu.memory_space<any>>, %arg1: memref<2x24x128xf32, #tpu.memory_space<any>>, %arg2: memref<2x24x128xf32, #tpu.memory_space<any>>, %arg3: memref<2x2x!tpu.dma_semaphore, #tpu.memory_space<semaphore_mem>>) attributes {dimension_semantics = [], scalar_prefetch = 0 : i64, scratch_operands = 1 : i64, tpu.core_type = #tpu.core_type<tc>} {
    %c1_i32 = arith.constant 1 : i32
    %c0_i32 = arith.constant 0 : i32
    %c0_i32_0 = arith.constant 0 : i32
    %c0_i32_1 = arith.constant 0 : i32
    %c0_i32_2 = arith.constant 0 : i32
    %c0_i32_3 = arith.constant 0 : i32
    %0 = tpu.memref_slice %arg0[%c1_i32, %c0_i32_1, %c0_i32_2, %c0_i32_3] : memref<3x2x16x128xf32, #tpu.memory_space<any>> -> memref<1x2x16x128xf32, #tpu.memory_space<any>>
    %1 = tpu.memref_squeeze %0 : memref<1x2x16x128xf32, #tpu.memory_space<any>> -> memref<2x16x128xf32, #tpu.memory_space<any>>
    %c0_i32_4 = arith.constant 0 : i32
    %c8_i32 = arith.constant 8 : i32
    %c0_i32_5 = arith.constant 0 : i32
    %2 = tpu.memref_slice %arg1[%c0_i32_4, %c8_i32, %c0_i32_5] : memref<2x24x128xf32, #tpu.memory_space<any>> -> memref<2x16x128xf32, #tpu.memory_space<any>>
    %3 = tpu.memref_slice %arg3[%c0_i32, %c0_i32_0] : memref<2x2x!tpu.dma_semaphore, #tpu.memory_space<semaphore_mem>> -> memref<1x1x!tpu.dma_semaphore, #tpu.memory_space<semaphore_mem>>
    %4 = tpu.memref_squeeze %3 : memref<1x1x!tpu.dma_semaphore, #tpu.memory_space<semaphore_mem>> -> memref<!tpu.dma_semaphore, #tpu.memory_space<semaphore_mem>>
    tpu.enqueue_dma source(%1 : memref<2x16x128xf32, #tpu.memory_space<any>>) target(%2 : memref<2x16x128xf32, #tpu.memory_space<any>>) target_semaphore(%4 : memref<!tpu.dma_semaphore, #tpu.memory_space<semaphore_mem>>)
    %c0_i32_6 = arith.constant 0 : i32
    %c0_i32_7 = arith.constant 0 : i32
    %c1_i32_8 = arith.constant 1 : i32
    %c0_i32_9 = arith.constant 0 : i32
    %c8_i32_10 = arith.constant 8 : i32
    %c0_i32_11 = arith.constant 0 : i32
    %5 = tpu.memref_slice %arg0[%c0_i32_6, %c0_i32_9, %c8_i32_10, %c0_i32_11] : memref<3x2x16x128xf32, #tpu.memory_space<any>> -> memref<1x2x8x128xf32, #tpu.memory_space<any>>
    %6 = tpu.memref_squeeze %5 : memref<1x2x8x128xf32, #tpu.memory_space<any>> -> memref<2x8x128xf32, #tpu.memory_space<any>>
    %c0_i32_12 = arith.constant 0 : i32
    %c0_i32_13 = arith.constant 0 : i32
    %c0_i32_14 = arith.constant 0 : i32
    %7 = tpu.memref_slice %arg1[%c0_i32_12, %c0_i32_13, %c0_i32_14] : memref<2x24x128xf32, #tpu.memory_space<any>> -> memref<2x8x128xf32, #tpu.memory_space<any>>
    %8 = tpu.memref_slice %arg3[%c0_i32_7, %c1_i32_8] : memref<2x2x!tpu.dma_semaphore, #tpu.memory_space<semaphore_mem>> -> memref<1x1x!tpu.dma_semaphore, #tpu.memory_space<semaphore_mem>>
    %9 = tpu.memref_squeeze %8 : memref<1x1x!tpu.dma_semaphore, #tpu.memory_space<semaphore_mem>> -> memref<!tpu.dma_semaphore, #tpu.memory_space<semaphore_mem>>
    tpu.enqueue_dma source(%6 : memref<2x8x128xf32, #tpu.memory_space<any>>) target(%7 : memref<2x8x128xf32, #tpu.memory_space<any>>) target_semaphore(%9 : memref<!tpu.dma_semaphore, #tpu.memory_space<semaphore_mem>>)
    %c2_i32 = arith.constant 2 : i32
    %c1_i32_15 = arith.constant 1 : i32
    %c0_i32_16 = arith.constant 0 : i32
    %c0_i32_17 = arith.constant 0 : i32
    %c0_i32_18 = arith.constant 0 : i32
    %c0_i32_19 = arith.constant 0 : i32
    %10 = tpu.memref_slice %arg0[%c2_i32, %c0_i32_17, %c0_i32_18, %c0_i32_19] : memref<3x2x16x128xf32, #tpu.memory_space<any>> -> memref<1x2x16x128xf32, #tpu.memory_space<any>>
    %11 = tpu.memref_squeeze %10 : memref<1x2x16x128xf32, #tpu.memory_space<any>> -> memref<2x16x128xf32, #tpu.memory_space<any>>
    %c0_i32_20 = arith.constant 0 : i32
    %c8_i32_21 = arith.constant 8 : i32
    %c0_i32_22 = arith.constant 0 : i32
    %12 = tpu.memref_slice %arg2[%c0_i32_20, %c8_i32_21, %c0_i32_22] : memref<2x24x128xf32, #tpu.memory_space<any>> -> memref<2x16x128xf32, #tpu.memory_space<any>>
    %13 = tpu.memref_slice %arg3[%c1_i32_15, %c0_i32_16] : memref<2x2x!tpu.dma_semaphore, #tpu.memory_space<semaphore_mem>> -> memref<1x1x!tpu.dma_semaphore, #tpu.memory_space<semaphore_mem>>
    %14 = tpu.memref_squeeze %13 : memref<1x1x!tpu.dma_semaphore, #tpu.memory_space<semaphore_mem>> -> memref<!tpu.dma_semaphore, #tpu.memory_space<semaphore_mem>>
    tpu.enqueue_dma source(%11 : memref<2x16x128xf32, #tpu.memory_space<any>>) target(%12 : memref<2x16x128xf32, #tpu.memory_space<any>>) target_semaphore(%14 : memref<!tpu.dma_semaphore, #tpu.memory_space<semaphore_mem>>)
    %c1_i32_23 = arith.constant 1 : i32
    %c1_i32_24 = arith.constant 1 : i32
    %c1_i32_25 = arith.constant 1 : i32
    %c0_i32_26 = arith.constant 0 : i32
    %c8_i32_27 = arith.constant 8 : i32
    %c0_i32_28 = arith.constant 0 : i32
    %15 = tpu.memref_slice %arg0[%c1_i32_23, %c0_i32_26, %c8_i32_27, %c0_i32_28] : memref<3x2x16x128xf32, #tpu.memory_space<any>> -> memref<1x2x8x128xf32, #tpu.memory_space<any>>
    %16 = tpu.memref_squeeze %15 : memref<1x2x8x128xf32, #tpu.memory_space<any>> -> memref<2x8x128xf32, #tpu.memory_space<any>>
    %c0_i32_29 = arith.constant 0 : i32
    %c0_i32_30 = arith.constant 0 : i32
    %c0_i32_31 = arith.constant 0 : i32
    %17 = tpu.memref_slice %arg2[%c0_i32_29, %c0_i32_30, %c0_i32_31] : memref<2x24x128xf32, #tpu.memory_space<any>> -> memref<2x8x128xf32, #tpu.memory_space<any>>
    %18 = tpu.memref_slice %arg3[%c1_i32_24, %c1_i32_25] : memref<2x2x!tpu.dma_semaphore, #tpu.memory_space<semaphore_mem>> -> memref<1x1x!tpu.dma_semaphore, #tpu.memory_space<semaphore_mem>>
    %19 = tpu.memref_squeeze %18 : memref<1x1x!tpu.dma_semaphore, #tpu.memory_space<semaphore_mem>> -> memref<!tpu.dma_semaphore, #tpu.memory_space<semaphore_mem>>
    tpu.enqueue_dma source(%16 : memref<2x8x128xf32, #tpu.memory_space<any>>) target(%17 : memref<2x8x128xf32, #tpu.memory_space<any>>) target_semaphore(%19 : memref<!tpu.dma_semaphore, #tpu.memory_space<semaphore_mem>>)
    %c1_i32_32 = arith.constant 1 : i32
    %c0_i32_33 = arith.constant 0 : i32
    %c0_i32_34 = arith.constant 0 : i32
    %c0_i32_35 = arith.constant 0 : i32
    %c0_i32_36 = arith.constant 0 : i32
    %c0_i32_37 = arith.constant 0 : i32
    %20 = tpu.memref_slice %arg0[%c1_i32_32, %c0_i32_35, %c0_i32_36, %c0_i32_37] : memref<3x2x16x128xf32, #tpu.memory_space<any>> -> memref<1x2x16x128xf32, #tpu.memory_space<any>>
    %21 = tpu.memref_squeeze %20 : memref<1x2x16x128xf32, #tpu.memory_space<any>> -> memref<2x16x128xf32, #tpu.memory_space<any>>
    %c0_i32_38 = arith.constant 0 : i32
    %c8_i32_39 = arith.constant 8 : i32
    %c0_i32_40 = arith.constant 0 : i32
    %22 = tpu.memref_slice %arg1[%c0_i32_38, %c8_i32_39, %c0_i32_40] : memref<2x24x128xf32, #tpu.memory_space<any>> -> memref<2x16x128xf32, #tpu.memory_space<any>>
    %23 = tpu.memref_slice %arg3[%c0_i32_33, %c0_i32_34] : memref<2x2x!tpu.dma_semaphore, #tpu.memory_space<semaphore_mem>> -> memref<1x1x!tpu.dma_semaphore, #tpu.memory_space<semaphore_mem>>
    %24 = tpu.memref_squeeze %23 : memref<1x1x!tpu.dma_semaphore, #tpu.memory_space<semaphore_mem>> -> memref<!tpu.dma_semaphore, #tpu.memory_space<semaphore_mem>>
    tpu.wait_dma2 semaphore(%24 : memref<!tpu.dma_semaphore, #tpu.memory_space<semaphore_mem>>) src(%21 : memref<2x16x128xf32, #tpu.memory_space<any>>) dst(%22 : memref<2x16x128xf32, #tpu.memory_space<any>>)
    %c0_i32_41 = arith.constant 0 : i32
    %c0_i32_42 = arith.constant 0 : i32
    %c1_i32_43 = arith.constant 1 : i32
    %c0_i32_44 = arith.constant 0 : i32
    %c8_i32_45 = arith.constant 8 : i32
    %c0_i32_46 = arith.constant 0 : i32
    %25 = tpu.memref_slice %arg0[%c0_i32_41, %c0_i32_44, %c8_i32_45, %c0_i32_46] : memref<3x2x16x128xf32, #tpu.memory_space<any>> -> memref<1x2x8x128xf32, #tpu.memory_space<any>>
    %26 = tpu.memref_squeeze %25 : memref<1x2x8x128xf32, #tpu.memory_space<any>> -> memref<2x8x128xf32, #tpu.memory_space<any>>
    %c0_i32_47 = arith.constant 0 : i32
    %c0_i32_48 = arith.constant 0 : i32
    %c0_i32_49 = arith.constant 0 : i32
    %27 = tpu.memref_slice %arg1[%c0_i32_47, %c0_i32_48, %c0_i32_49] : memref<2x24x128xf32, #tpu.memory_space<any>> -> memref<2x8x128xf32, #tpu.memory_space<any>>
    %28 = tpu.memref_slice %arg3[%c0_i32_42, %c1_i32_43] : memref<2x2x!tpu.dma_semaphore, #tpu.memory_space<semaphore_mem>> -> memref<1x1x!tpu.dma_semaphore, #tpu.memory_space<semaphore_mem>>
    %29 = tpu.memref_squeeze %28 : memref<1x1x!tpu.dma_semaphore, #tpu.memory_space<semaphore_mem>> -> memref<!tpu.dma_semaphore, #tpu.memory_space<semaphore_mem>>
    tpu.wait_dma2 semaphore(%29 : memref<!tpu.dma_semaphore, #tpu.memory_space<semaphore_mem>>) src(%26 : memref<2x8x128xf32, #tpu.memory_space<any>>) dst(%27 : memref<2x8x128xf32, #tpu.memory_space<any>>)
    %c2_i32_50 = arith.constant 2 : i32
    %c1_i32_51 = arith.constant 1 : i32
    %c0_i32_52 = arith.constant 0 : i32
    %c0_i32_53 = arith.constant 0 : i32
    %c0_i32_54 = arith.constant 0 : i32
    %c0_i32_55 = arith.constant 0 : i32
    %30 = tpu.memref_slice %arg0[%c2_i32_50, %c0_i32_53, %c0_i32_54, %c0_i32_55] : memref<3x2x16x128xf32, #tpu.memory_space<any>> -> memref<1x2x16x128xf32, #tpu.memory_space<any>>
    %31 = tpu.memref_squeeze %30 : memref<1x2x16x128xf32, #tpu.memory_space<any>> -> memref<2x16x128xf32, #tpu.memory_space<any>>
    %c0_i32_56 = arith.constant 0 : i32
    %c8_i32_57 = arith.constant 8 : i32
    %c0_i32_58 = arith.constant 0 : i32
    %32 = tpu.memref_slice %arg2[%c0_i32_56, %c8_i32_57, %c0_i32_58] : memref<2x24x128xf32, #tpu.memory_space<any>> -> memref<2x16x128xf32, #tpu.memory_space<any>>
    %33 = tpu.memref_slice %arg3[%c1_i32_51, %c0_i32_52] : memref<2x2x!tpu.dma_semaphore, #tpu.memory_space<semaphore_mem>> -> memref<1x1x!tpu.dma_semaphore, #tpu.memory_space<semaphore_mem>>
    %34 = tpu.memref_squeeze %33 : memref<1x1x!tpu.dma_semaphore, #tpu.memory_space<semaphore_mem>> -> memref<!tpu.dma_semaphore, #tpu.memory_space<semaphore_mem>>
    tpu.wait_dma2 semaphore(%34 : memref<!tpu.dma_semaphore, #tpu.memory_space<semaphore_mem>>) src(%31 : memref<2x16x128xf32, #tpu.memory_space<any>>) dst(%32 : memref<2x16x128xf32, #tpu.memory_space<any>>)
    %c1_i32_59 = arith.constant 1 : i32
    %c1_i32_60 = arith.constant 1 : i32
    %c1_i32_61 = arith.constant 1 : i32
    %c0_i32_62 = arith.constant 0 : i32
    %c8_i32_63 = arith.constant 8 : i32
    %c0_i32_64 = arith.constant 0 : i32
    %35 = tpu.memref_slice %arg0[%c1_i32_59, %c0_i32_62, %c8_i32_63, %c0_i32_64] : memref<3x2x16x128xf32, #tpu.memory_space<any>> -> memref<1x2x8x128xf32, #tpu.memory_space<any>>
    %36 = tpu.memref_squeeze %35 : memref<1x2x8x128xf32, #tpu.memory_space<any>> -> memref<2x8x128xf32, #tpu.memory_space<any>>
    %c0_i32_65 = arith.constant 0 : i32
    %c0_i32_66 = arith.constant 0 : i32
    %c0_i32_67 = arith.constant 0 : i32
    %37 = tpu.memref_slice %arg2[%c0_i32_65, %c0_i32_66, %c0_i32_67] : memref<2x24x128xf32, #tpu.memory_space<any>> -> memref<2x8x128xf32, #tpu.memory_space<any>>
    %38 = tpu.memref_slice %arg3[%c1_i32_60, %c1_i32_61] : memref<2x2x!tpu.dma_semaphore, #tpu.memory_space<semaphore_mem>> -> memref<1x1x!tpu.dma_semaphore, #tpu.memory_space<semaphore_mem>>
    %39 = tpu.memref_squeeze %38 : memref<1x1x!tpu.dma_semaphore, #tpu.memory_space<semaphore_mem>> -> memref<!tpu.dma_semaphore, #tpu.memory_space<semaphore_mem>>
    tpu.wait_dma2 semaphore(%39 : memref<!tpu.dma_semaphore, #tpu.memory_space<semaphore_mem>>) src(%36 : memref<2x8x128xf32, #tpu.memory_space<any>>) dst(%37 : memref<2x8x128xf32, #tpu.memory_space<any>>)
    return
  }
}

</mosaic_0001>

<llo_original>
// kernel: tpu_custom_call.1
$region0: #{tpu_custom_call.1}
  #allocation0 [shape = 'u32[]', space=smem, size = 0x4, offset = 0x4, fixed_abs, tag = 'smem constant byte address 0x4 - core index']
  #allocation1 [shape = 'u32[72,128]{1,0:T(1,128)}', space=vmem, size = 0x9000, scoped, tag = 'internal scratch']
  #allocation2 [shape = 's32[4]{0}', space=sflag, size = 0x10, scoped, tag = 'scratch operand']
  #allocation3 [shape = 's32[]', space=sflag, size = 0x4, offset = 0, fixed_abs, tag = 'sflag constant byte address 0x0 - dummy sync flag']
  #allocation5 [shape = 's32[]', space=sflag, size = 0x4, offset = 0, fixed_abs, tag = 'sflag constant byte address 0x0 - dummy sync flag']
  #allocation7 [shape = 's32[]', space=sflag, size = 0x4, offset = 0, fixed_abs, tag = 'sflag constant byte address 0x0 - dummy sync flag']
  #allocation9 [shape = 's32[]', space=sflag, size = 0x4, offset = 0, fixed_abs, tag = 'sflag constant byte address 0x0 - dummy sync flag']
  %s0 = inlined_call_operand.hbm [shape: f32[3,2,16,128], index: 0, kind: input, shape index: {}]
  %s1 = inlined_call_operand.hbm [shape: f32[2,24,128], index: 1, kind: output, shape index: {0}]
  %s2 = inlined_call_operand.hbm [shape: f32[2,24,128], index: 2, kind: output, shape index: {1}]
  %3 = xla_tuple %s1, %s2
  %s4 = sld [smem:[#allocation0]]
  $region2: #{tpu_custom_call.1} parent=0
    _
  %s6 = ssub.s32 1, %s4
  %s7 = scalar_select 0, %s6, %s4
  $region1: #{tpu_custom_call.1} parent=0
    #allocation4 [shape = 'u32[3]{0}', space=smem, size = 0xc, scoped, tag = 'DMA stride descriptor']
    #allocation6 [shape = 'u32[3]{0}', space=smem, size = 0xc, scoped, tag = 'DMA stride descriptor']
    #allocation8 [shape = 'u32[3]{0}', space=smem, size = 0xc, scoped, tag = 'DMA stride descriptor']
    #allocation10 [shape = 'u32[3]{0}', space=smem, size = 0xc, scoped, tag = 'DMA stride descriptor']
    %s8 = scalar_lea.hbm %s0, 32
    %s9 = scalar_lea.hbm %s1, 8
    %s11 = sshll.u32 1, 14
    %s12 = sxor.u32 4294967295, %s11
    %s14 = sshll.u32 %s8, 4
    %s15 = int_to_ptr.hbm [resolvable:$true] %s14
    %s16 = sshll.u32 %s9, 4
    %s17 = int_to_ptr.hbm [resolvable:$true] %s16
    %21 = sst [smem:[#allocation4]] 256
    %s22 = scalar_lea.smem [#allocation4], 1
    %23 = sst [smem:[%s22]] 384
    %s24 = scalar_lea.smem [#allocation4], 2
    %25 = sst [smem:[%s24]] 16
    %27 = dma.general %s15, 512, %s17, [#allocation2], [#allocation3], [#allocation4], 0, 0
    %s28 = scalar_lea.hbm %s0, 8
    %s29 = scalar_lea.sflag [#allocation2], 1
    %s31 = sshll.u32 1, 14
    %s32 = sxor.u32 4294967295, %s31
    %s34 = sshll.u32 %s28, 4
    %s35 = int_to_ptr.hbm [resolvable:$true] %s34
    %s36 = sshll.u32 %s1, 4
    %s37 = int_to_ptr.hbm [resolvable:$true] %s36
    %41 = sst [smem:[#allocation6]] 256
    %s42 = scalar_lea.smem [#allocation6], 1
    %43 = sst [smem:[%s42]] 384
    %s44 = scalar_lea.smem [#allocation6], 2
    %45 = sst [smem:[%s44]] 8
    %47 = dma.general %s35, 256, %s37, %s29, [#allocation5], [#allocation6], 0, 0
    %s48 = scalar_lea.hbm %s0, 64
    %s49 = scalar_lea.hbm %s2, 8
    %s50 = scalar_lea.sflag [#allocation2], 2
    %s52 = sshll.u32 1, 14
    %s53 = sxor.u32 4294967295, %s52
    %s55 = sshll.u32 %s48, 4
    %s56 = int_to_ptr.hbm [resolvable:$true] %s55
    %s57 = sshll.u32 %s49, 4
    %s58 = int_to_ptr.hbm [resolvable:$true] %s57
    %62 = sst [smem:[#allocation8]] 256
    %s63 = scalar_lea.smem [#allocation8], 1
    %64 = sst [smem:[%s63]] 384
    %s65 = scalar_lea.smem [#allocation8], 2
    %66 = sst [smem:[%s65]] 16
    %68 = dma.general %s56, 512, %s58, %s50, [#allocation7], [#allocation8], 0, 0
    %s69 = scalar_lea.hbm %s0, 40
    %s70 = scalar_lea.sflag [#allocation2], 3
    %s72 = sshll.u32 1, 14
    %s73 = sxor.u32 4294967295, %s72
    %s75 = sshll.u32 %s69, 4
    %s76 = int_to_ptr.hbm [resolvable:$true] %s75
    %s77 = sshll.u32 %s2, 4
    %s78 = int_to_ptr.hbm [resolvable:$true] %s77
    %82 = sst [smem:[#allocation10]] 256
    %s83 = scalar_lea.smem [#allocation10], 1
    %84 = sst [smem:[%s83]] 384
    %s85 = scalar_lea.smem [#allocation10], 2
    %86 = sst [smem:[%s85]] 8
    %88 = dma.general %s76, 256, %s78, %s70, [#allocation9], [#allocation10], 0, 0
    %s89 = smul.u32 2, 16
    %s90 = smul.u32 %s89, 1
    %s91 = sshll.u32 %s90, 4
    %92 = dma.done [#allocation2], %s91
    %s93 = smul.u32 2, 8
    %s94 = smul.u32 %s93, 1
    %s95 = sshll.u32 %s94, 4
    %96 = dma.done %s29, %s95
    %s97 = sshll.u32 %s90, 4
    %98 = dma.done %s50, %s97
    %s99 = sshll.u32 %s94, 4
    %100 = dma.done %s70, %s99
  %101 = vsyncmov [#allocation2]
  %s102 = vpop.sfrf %101
  %p103 = scmp.eq.s32.totalorder %s102, 0
  %p104 = pneg %p103
  %106 = shalt.err (%p104)
  %s107 = scalar_lea.sflag [#allocation2], 1
  %108 = vsyncmov %s107
  %s109 = vpop.sfrf %108
  %p110 = scmp.eq.s32.totalorder %s109, 0
  %p111 = pneg %p110
  %113 = shalt.err (%p111)
  %s114 = scalar_lea.sflag [#allocation2], 2
  %115 = vsyncmov %s114
  %s116 = vpop.sfrf %115
  %p117 = scmp.eq.s32.totalorder %s116, 0
  %p118 = pneg %p117
  %120 = shalt.err (%p118)
  %s121 = scalar_lea.sflag [#allocation2], 3
  %122 = vsyncmov %s121
  %s123 = vpop.sfrf %122
  %p124 = scmp.eq.s32.totalorder %s123, 0
  %p125 = pneg %p124
  %127 = shalt.err (%p125)

</llo_original>
